<compile_context>
chip_gen: v5e
topology: v5e:2x2
jax: 0.10.0
libtpu: 0.0.40
codegen_flags: <defaults>
</compile_context>

<pallas_src>
import numpy as np
import jax
import jax.numpy as jnp
from jax import lax
from jax.experimental import pallas as pl
from jax.experimental.pallas import tpu as pltpu


def make_ours_loss_global_kernel(b, c, tile_b, threshold, reweight,
                                 reweight_renorm, mean_outside_mask,
                                 need_row_mask):
    """Build the kernel with all hyper-parameters closed over (static)."""
    inv_threshold = (1.0 / threshold) if threshold > 0.0 else float("inf")

    def kernel(weak_ref, strong_ref, out_ref, counts_acc, ce_acc):
        @pl.when(pl.program_id(0) == 0)
        def _init():
            counts_acc[...] = jnp.zeros_like(counts_acc)
            ce_acc[...] = jnp.zeros_like(ce_acc)

        weak = weak_ref[...].astype(jnp.float32)      # (tile_b, c)
        strong = strong_ref[...].astype(jnp.float32)  # (tile_b, c)

        # confidence: max(softmax(weak)) > threshold  <=>  sum(exp(x - max)) < 1/threshold
        w_max = jnp.max(weak, axis=1, keepdims=True)                      # (tile_b, 1)
        w_sumexp = jnp.sum(jnp.exp(weak - w_max), axis=1, keepdims=True)  # (tile_b, 1)
        mask = w_sumexp < inv_threshold                                   # (tile_b, 1)

        if need_row_mask:  # batch tail of the last tile (padded block rows)
            row = (lax.broadcasted_iota(jnp.int32, (tile_b, 1), 0)
                   + pl.program_id(0) * tile_b)
            mask = jnp.logical_and(mask, row < b)

        # argmax of weak logits == PyTorch target (ties -> smallest index)
        col = lax.broadcasted_iota(jnp.int32, (tile_b, c), 1)
        is_max = weak == w_max
        tgt = jnp.min(jnp.where(is_max, col, c), axis=1, keepdims=True)   # (tile_b, 1)
        onehot = col == tgt                                               # (tile_b, c)

        # -log_softmax(strong) gathered at the target class
        s_max = jnp.max(strong, axis=1, keepdims=True)
        s_lse = s_max + jnp.log(jnp.sum(jnp.exp(strong - s_max), axis=1, keepdims=True))
        s_tgt = jnp.sum(jnp.where(onehot, strong, 0.0), axis=1, keepdims=True)
        # select (not multiply) so garbage/NaN in padded tail rows is dropped
        ce = jnp.where(mask, s_lse - s_tgt, 0.0)                          # (tile_b, 1)

        masked_onehot = jnp.logical_and(onehot, mask).astype(jnp.float32)  # (tile_b, c)
        counts_acc[...] += jnp.sum(masked_onehot, axis=0, keepdims=True)   # (1, c)
        ce_acc[...] += jnp.sum(masked_onehot * ce, axis=0, keepdims=True)  # (1, c)

        @pl.when(pl.program_id(0) == pl.num_programs(0) - 1)
        def _finalize():
            counts = counts_acc[...]                                      # (1, c)
            ce_sum = ce_acc[...]                                          # (1, c)
            n = jnp.sum(counts, axis=1, keepdims=True)                    # (1, 1)
            counts_safe = jnp.maximum(counts, 1.0)
            # NOTE: classes absent from the masked set get a weight different from
            # PyTorch's default 1.0, but they contribute 0 to both numerator and
            # denominator, so the result is identical.
            if reweight_renorm:
                n_cls = jnp.maximum(
                    jnp.sum((counts > 0.0).astype(jnp.float32), axis=1, keepdims=True),
                    1.0)
                w_cls = n / n_cls / counts_safe                           # (1, c)
            elif reweight:
                w_cls = n / counts_safe                                   # (1, c)
            else:
                w_cls = None

            if w_cls is not None:
                total = jnp.sum(w_cls * ce_sum, axis=1, keepdims=True)    # sum_i w[t_i]*ce_i
            else:
                total = jnp.sum(ce_sum, axis=1, keepdims=True)

            if mean_outside_mask:
                denom = jnp.full((1, 1), float(b), jnp.float32)
            elif w_cls is not None:
                denom = jnp.sum(w_cls * counts, axis=1, keepdims=True)    # sum_i w[t_i]
            else:
                denom = n
            denom = jnp.maximum(denom, 1e-30)

            out_ref[...] = jnp.where(n > 0.0, total / denom,
                                     jnp.zeros((1, 1), jnp.float32))

    return kernel


def ours_loss_global(head_id, anchors_weak, anchors_strong, *,
                     threshold, reweight=False, reweight_renorm=False,
                     mean_outside_mask=False, max_tile_rows=None):
    """JAX wrapper mirroring OursLossGlobal.forward (loss value only).

    head_id only gates stateful buffer updates (num_counts / count_ema) and logging
    in the PyTorch module; it does not affect the returned loss.
    """
    del head_id
    b, c = anchors_weak.shape
    itemsize = jnp.dtype(anchors_weak.dtype).itemsize

    # Size the batch tile so 2 inputs x 2 pipeline buffers stay <= ~16 MiB
    # (fits v5e's 16 MiB scoped default comfortably and leaves headroom on v7x).
    target_bytes = 16 * 1024 * 1024
    tile_cap = max(8, (target_bytes // (4 * c * itemsize)) // 8 * 8)
    if max_tile_rows is not None:
        tile_cap = min(tile_cap, max(8, (max_tile_rows // 8) * 8))
    if b <= tile_cap:
        tile_b, num_tiles = b, 1          # single full-dim block (no alignment needed)
    else:
        tile_b = tile_cap                 # multiple of 8
        num_tiles = -(-b // tile_b)
    need_row_mask = (num_tiles * tile_b != b)

    kernel = make_ours_loss_global_kernel(
        b, c, tile_b, float(threshold), bool(reweight),
        bool(reweight_renorm), bool(mean_outside_mask), need_row_mask)

    pipeline_bytes = 4 * tile_b * c * itemsize  # 2 inputs x 2 buffers
    vmem_limit = int(max(32 * 1024 * 1024,
                         min(pipeline_bytes + (8 << 20), 56 * 1024 * 1024)))

    out = pl.pallas_call(
        kernel,
        out_shape=jax.ShapeDtypeStruct((1, 1), jnp.float32),
        grid_spec=pltpu.PrefetchScalarGridSpec(
            num_scalar_prefetch=0,
            grid=(num_tiles,),
            in_specs=[pl.BlockSpec((tile_b, c), lambda i: (i, 0)),
                      pl.BlockSpec((tile_b, c), lambda i: (i, 0))],
            out_specs=pl.BlockSpec((1, 1), lambda i: (0, 0)),
            scratch_shapes=[pltpu.VMEM((1, c), jnp.float32),   # per-class masked counts
                            pltpu.VMEM((1, c), jnp.float32)],  # per-class masked CE sums
        ),
        compiler_params=pltpu.CompilerParams(
            dimension_semantics=("arbitrary",),
            vmem_limit_bytes=vmem_limit),
    )(anchors_weak, anchors_strong)
    return out[0, 0]


def reference_loss_np(weak, strong, threshold, reweight, reweight_renorm,
                      mean_outside_mask):
    """NumPy transcription of the PyTorch forward (for verification)."""
    weak = np.asarray(weak, np.float64)
    strong = np.asarray(strong, np.float64)
    b, c = weak.shape
    z = weak - weak.max(axis=1, keepdims=True)
    prob = np.exp(z) / np.exp(z).sum(axis=1, keepdims=True)
    max_prob = prob.max(axis=1)
    target = prob.argmax(axis=1)
    mask = max_prob > threshold
    tm = target[mask]
    n = tm.size
    if n == 0:
        return 0.0
    weight = None
    if reweight_renorm:
        idx, counts = np.unique(tm, return_counts=True)
        freq = float(n) / len(idx) / counts.astype(np.float64)
        weight = np.ones(c); weight[idx] = freq
    elif reweight:
        idx, counts = np.unique(tm, return_counts=True)
        freq = 1.0 / (counts.astype(np.float64) / n)
        weight = np.ones(c); weight[idx] = freq
    inp = strong[mask]
    zs = inp - inp.max(axis=1, keepdims=True)
    log_prob = -(zs - np.log(np.exp(zs).sum(axis=1, keepdims=True)))
    if weight is not None:
        log_prob = log_prob * weight[None, :]
    loss = log_prob[np.arange(n), tm]
    if mean_outside_mask:
        return float(loss.sum() / b)
    elif weight is not None:
        return float((loss / weight[tm].sum()).sum())
    else:
        return float(loss.mean())


if __name__ == "__main__":
    # Small shapes consistent with the module: logits of shape (batch, num_classes=14)
    b, num_classes = 16, 14
    threshold = 0.5

    key = jax.random.PRNGKey(0)
    k1, k2, k3, k4 = jax.random.split(key, 4)
    # scale weak logits so a mix of rows passes / fails the confidence threshold
    anchors_weak = 3.0 * jax.random.normal(k1, (b, num_classes), jnp.float32)
    anchors_strong = jax.random.normal(k2, (b, num_classes), jnp.float32)

    cases = [
        dict(reweight=True, reweight_renorm=False, mean_outside_mask=False),
        dict(reweight=False, reweight_renorm=False, mean_outside_mask=False),
        dict(reweight=False, reweight_renorm=True, mean_outside_mask=False),
        dict(reweight=False, reweight_renorm=False, mean_outside_mask=True),
    ]
    for cfg in cases:
        loss = ours_loss_global(0, anchors_weak, anchors_strong,
                                threshold=threshold, **cfg)
        loss = jax.block_until_ready(loss)
        ref = reference_loss_np(np.asarray(anchors_weak), np.asarray(anchors_strong),
                                threshold, cfg["reweight"], cfg["reweight_renorm"],
                                cfg["mean_outside_mask"])
        assert np.allclose(np.asarray(loss), ref, rtol=1e-4, atol=1e-4), \
            (cfg, float(loss), ref)

    # Exercise the batch-tiled (grid) path with a ragged tail: b=20, tile=8 -> 3 steps.
    b2 = 20
    weak2 = 3.0 * jax.random.normal(k3, (b2, num_classes), jnp.float32)
    strong2 = jax.random.normal(k4, (b2, num_classes), jnp.float32)
    loss2 = ours_loss_global(0, weak2, strong2, threshold=threshold,
                             reweight=True, max_tile_rows=8)
    loss2 = jax.block_until_ready(loss2)
    ref2 = reference_loss_np(np.asarray(weak2), np.asarray(strong2),
                             threshold, True, False, False)
    assert np.allclose(np.asarray(loss2), ref2, rtol=1e-4, atol=1e-4), (float(loss2), ref2)

    print("KERNEL_OK")
</pallas_src>

<mosaic_0001>
module attributes {stable_mosaic.version = 11 : i64} {
  func.func @kernel(%arg0: i32, %arg1: memref<16x14xf32, #tpu.memory_space<vmem>>, %arg2: memref<16x14xf32, #tpu.memory_space<vmem>>, %arg3: memref<1x1xf32, #tpu.memory_space<vmem>>, %arg4: memref<1x14xf32, #tpu.memory_space<vmem>>, %arg5: memref<1x14xf32, #tpu.memory_space<vmem>>) attributes {dimension_semantics = [#tpu.dimension_semantics<arbitrary>], iteration_bounds = array<i64: 1>, scalar_prefetch = 0 : i64, scratch_operands = 2 : i64, tpu.core_type = #tpu.core_type<tc>, window_params = [{transform_indices = @transform_0, window_bounds = array<i64: 16, 14>}, {transform_indices = @transform_1, window_bounds = array<i64: 16, 14>}, {pipeline_mode = #tpu.pipeline_mode<synchronous>, transform_indices = @transform_2, window_bounds = array<i64: 1, 1>}]} {
    %c0_i32 = arith.constant 0 : i32
    %0 = arith.cmpi eq, %arg0, %c0_i32 : i32
    %1 = arith.extui %0 : i1 to i32
    %c0_i32_0 = arith.constant 0 : i32
    %2 = arith.cmpi ne, %1, %c0_i32_0 : i32
    scf.if %2 {
      %cst_24 = arith.constant 0.000000e+00 : f32
      %58 = vector.broadcast %cst_24 : f32 to vector<1x14xf32>
      %c0_25 = arith.constant 0 : index
      %c0_26 = arith.constant 0 : index
      %59 = vector.load %arg4[%c0_25, %c0_26] : memref<1x14xf32, #tpu.memory_space<vmem>>, vector<1x14xf32>
      tpu.vector_store %arg4[%c0_25, %c0_26], %58 {strides = array<i32>} : memref<1x14xf32, #tpu.memory_space<vmem>>, vector<1x14xf32>,
      %cst_27 = arith.constant 0.000000e+00 : f32
      %60 = vector.broadcast %cst_27 : f32 to vector<1x14xf32>
      %c0_28 = arith.constant 0 : index
      %c0_29 = arith.constant 0 : index
      %61 = vector.load %arg5[%c0_28, %c0_29] : memref<1x14xf32, #tpu.memory_space<vmem>>, vector<1x14xf32>
      tpu.vector_store %arg5[%c0_28, %c0_29], %60 {strides = array<i32>} : memref<1x14xf32, #tpu.memory_space<vmem>>, vector<1x14xf32>,
    } else {
    }
    %c0 = arith.constant 0 : index
    %c0_1 = arith.constant 0 : index
    %3 = vector.load %arg1[%c0, %c0_1] : memref<16x14xf32, #tpu.memory_space<vmem>>, vector<16x14xf32>
    %c0_2 = arith.constant 0 : index
    %c0_3 = arith.constant 0 : index
    %4 = vector.load %arg2[%c0_2, %c0_3] : memref<16x14xf32, #tpu.memory_space<vmem>>, vector<16x14xf32>
    %cst = arith.constant dense<0xFF800000> : vector<16xf32>
    %5 = vector.multi_reduction <maximumf>, %3, %cst [1] : vector<16x14xf32> to vector<16xf32>
    %6 = vector.shape_cast %5 : vector<16xf32> to vector<16x1xf32>
    %7 = vector.broadcast %6 : vector<16x1xf32> to vector<16x14xf32>
    %8 = arith.subf %3, %7 : vector<16x14xf32>
    %9 = math.exp %8 : vector<16x14xf32>
    %cst_4 = arith.constant dense<0.000000e+00> : vector<16xf32>
    %10 = vector.multi_reduction <add>, %9, %cst_4 [1] : vector<16x14xf32> to vector<16xf32>
    %11 = vector.shape_cast %10 : vector<16xf32> to vector<16x1xf32>
    %cst_5 = arith.constant 2.000000e+00 : f32
    %12 = vector.broadcast %cst_5 : f32 to vector<16x1xf32>
    %13 = arith.cmpf olt, %11, %12 : vector<16x1xf32>
    %14 = tpu.iota {dimensions = array<i32: 1>} : vector<16x14xi32>
    %15 = vector.broadcast %6 : vector<16x1xf32> to vector<16x14xf32>
    %16 = arith.cmpf oeq, %3, %15 : vector<16x14xf32>
    %c14_i32 = arith.constant 14 : i32
    %17 = vector.broadcast %c14_i32 : i32 to vector<16x14xi32>
    %18 = arith.select %16, %14, %17 : vector<16x14xi1>, vector<16x14xi32>
    %cst_6 = arith.constant dense<2147483647> : vector<16xi32>
    %19 = vector.multi_reduction <minsi>, %18, %cst_6 [1] : vector<16x14xi32> to vector<16xi32>
    %20 = vector.shape_cast %19 : vector<16xi32> to vector<16x1xi32>
    %21 = vector.broadcast %20 : vector<16x1xi32> to vector<16x14xi32>
    %22 = arith.cmpi eq, %14, %21 : vector<16x14xi32>
    %cst_7 = arith.constant dense<0xFF800000> : vector<16xf32>
    %23 = vector.multi_reduction <maximumf>, %4, %cst_7 [1] : vector<16x14xf32> to vector<16xf32>
    %24 = vector.shape_cast %23 : vector<16xf32> to vector<16x1xf32>
    %25 = vector.broadcast %24 : vector<16x1xf32> to vector<16x14xf32>
    %26 = arith.subf %4, %25 : vector<16x14xf32>
    %27 = math.exp %26 : vector<16x14xf32>
    %cst_8 = arith.constant dense<0.000000e+00> : vector<16xf32>
    %28 = vector.multi_reduction <add>, %27, %cst_8 [1] : vector<16x14xf32> to vector<16xf32>
    %29 = vector.shape_cast %28 : vector<16xf32> to vector<16x1xf32>
    %30 = math.log %29 : vector<16x1xf32>
    %31 = arith.addf %24, %30 : vector<16x1xf32>
    %cst_9 = arith.constant 0.000000e+00 : f32
    %32 = vector.broadcast %cst_9 : f32 to vector<16x14xf32>
    %33 = arith.select %22, %4, %32 : vector<16x14xi1>, vector<16x14xf32>
    %cst_10 = arith.constant dense<0.000000e+00> : vector<16xf32>
    %34 = vector.multi_reduction <add>, %33, %cst_10 [1] : vector<16x14xf32> to vector<16xf32>
    %35 = vector.shape_cast %34 : vector<16xf32> to vector<16x1xf32>
    %36 = arith.subf %31, %35 : vector<16x1xf32>
    %cst_11 = arith.constant 0.000000e+00 : f32
    %37 = vector.broadcast %cst_11 : f32 to vector<16x1xf32>
    %38 = arith.select %13, %36, %37 : vector<16x1xi1>, vector<16x1xf32>
    %39 = vector.broadcast %13 : vector<16x1xi1> to vector<16x14xi1>
    %40 = arith.andi %22, %39 : vector<16x14xi1>
    %41 = arith.extui %40 : vector<16x14xi1> to vector<16x14xi32>
    %42 = arith.sitofp %41 : vector<16x14xi32> to vector<16x14xf32>
    %c0_12 = arith.constant 0 : index
    %c0_13 = arith.constant 0 : index
    %43 = vector.load %arg4[%c0_12, %c0_13] : memref<1x14xf32, #tpu.memory_space<vmem>>, vector<1x14xf32>
    %cst_14 = arith.constant dense<0.000000e+00> : vector<14xf32>
    %44 = vector.multi_reduction <add>, %42, %cst_14 [0] : vector<16x14xf32> to vector<14xf32>
    %45 = vector.shape_cast %44 : vector<14xf32> to vector<1x14xf32>
    %46 = arith.addf %43, %45 : vector<1x14xf32>
    %c0_15 = arith.constant 0 : index
    %c0_16 = arith.constant 0 : index
    %47 = vector.load %arg4[%c0_15, %c0_16] : memref<1x14xf32, #tpu.memory_space<vmem>>, vector<1x14xf32>
    tpu.vector_store %arg4[%c0_15, %c0_16], %46 {strides = array<i32>} : memref<1x14xf32, #tpu.memory_space<vmem>>, vector<1x14xf32>,
    %c0_17 = arith.constant 0 : index
    %c0_18 = arith.constant 0 : index
    %48 = vector.load %arg5[%c0_17, %c0_18] : memref<1x14xf32, #tpu.memory_space<vmem>>, vector<1x14xf32>
    %49 = vector.broadcast %38 : vector<16x1xf32> to vector<16x14xf32>
    %50 = arith.mulf %42, %49 : vector<16x14xf32>
    %cst_19 = arith.constant dense<0.000000e+00> : vector<14xf32>
    %51 = vector.multi_reduction <add>, %50, %cst_19 [0] : vector<16x14xf32> to vector<14xf32>
    %52 = vector.shape_cast %51 : vector<14xf32> to vector<1x14xf32>
    %53 = arith.addf %48, %52 : vector<1x14xf32>
    %c0_20 = arith.constant 0 : index
    %c0_21 = arith.constant 0 : index
    %54 = vector.load %arg5[%c0_20, %c0_21] : memref<1x14xf32, #tpu.memory_space<vmem>>, vector<1x14xf32>
    tpu.vector_store %arg5[%c0_20, %c0_21], %53 {strides = array<i32>} : memref<1x14xf32, #tpu.memory_space<vmem>>, vector<1x14xf32>,
    %c0_i32_22 = arith.constant 0 : i32
    %55 = arith.cmpi eq, %arg0, %c0_i32_22 : i32
    %56 = arith.extui %55 : i1 to i32
    %c0_i32_23 = arith.constant 0 : i32
    %57 = arith.cmpi ne, %56, %c0_i32_23 : i32
    scf.if %57 {
      %c0_24 = arith.constant 0 : index
      %c0_25 = arith.constant 0 : index
      %58 = vector.load %arg4[%c0_24, %c0_25] : memref<1x14xf32, #tpu.memory_space<vmem>>, vector<1x14xf32>
      %c0_26 = arith.constant 0 : index
      %c0_27 = arith.constant 0 : index
      %59 = vector.load %arg5[%c0_26, %c0_27] : memref<1x14xf32, #tpu.memory_space<vmem>>, vector<1x14xf32>
      %cst_28 = arith.constant dense<0.000000e+00> : vector<1xf32>
      %60 = vector.multi_reduction <add>, %58, %cst_28 [1] : vector<1x14xf32> to vector<1xf32>
      %61 = vector.shape_cast %60 : vector<1xf32> to vector<1x1xf32>
      %cst_29 = arith.constant 1.000000e+00 : f32
      %62 = vector.broadcast %cst_29 : f32 to vector<1x14xf32>
      %63 = arith.maximumf %58, %62 : vector<1x14xf32>
      %64 = vector.broadcast %61 : vector<1x1xf32> to vector<1x14xf32>
      %65 = arith.divf %64, %63 : vector<1x14xf32>
      %66 = arith.mulf %65, %59 : vector<1x14xf32>
      %cst_30 = arith.constant dense<0.000000e+00> : vector<1xf32>
      %67 = vector.multi_reduction <add>, %66, %cst_30 [1] : vector<1x14xf32> to vector<1xf32>
      %68 = vector.shape_cast %67 : vector<1xf32> to vector<1x1xf32>
      %69 = arith.mulf %65, %58 : vector<1x14xf32>
      %cst_31 = arith.constant dense<0.000000e+00> : vector<1xf32>
      %70 = vector.multi_reduction <add>, %69, %cst_31 [1] : vector<1x14xf32> to vector<1xf32>
      %71 = vector.shape_cast %70 : vector<1xf32> to vector<1x1xf32>
      %cst_32 = arith.constant 1.000000e-30 : f32
      %72 = vector.broadcast %cst_32 : f32 to vector<1x1xf32>
      %73 = arith.maximumf %71, %72 : vector<1x1xf32>
      %cst_33 = arith.constant 0.000000e+00 : f32
      %74 = vector.broadcast %cst_33 : f32 to vector<1x1xf32>
      %75 = arith.cmpf ogt, %61, %74 : vector<1x1xf32>
      %76 = arith.divf %68, %73 : vector<1x1xf32>
      %cst_34 = arith.constant 0.000000e+00 : f32
      %77 = vector.broadcast %cst_34 : f32 to vector<1x1xf32>
      %78 = arith.select %75, %76, %77 : vector<1x1xi1>, vector<1x1xf32>
      %c0_35 = arith.constant 0 : index
      %c0_36 = arith.constant 0 : index
      %79 = vector.load %arg3[%c0_35, %c0_36] : memref<1x1xf32, #tpu.memory_space<vmem>>, vector<1x1xf32>
      tpu.vector_store %arg3[%c0_35, %c0_36], %78 {strides = array<i32>} : memref<1x1xf32, #tpu.memory_space<vmem>>, vector<1x1xf32>,
    } else {
    }
    return
  }
  func.func @transform_0(%arg0: i32) -> (i32, i32) {
    %c0_i32 = arith.constant 0 : i32
    %c0_i32_0 = arith.constant 0 : i32
    return %arg0, %c0_i32 : i32, i32
  }
  func.func @transform_1(%arg0: i32) -> (i32, i32) {
    %c0_i32 = arith.constant 0 : i32
    %c0_i32_0 = arith.constant 0 : i32
    return %arg0, %c0_i32 : i32, i32
  }
  func.func @transform_2(%arg0: i32) -> (i32, i32) {
    %c0_i32 = arith.constant 0 : i32
    %c0_i32_0 = arith.constant 0 : i32
    %c0_i32_1 = arith.constant 0 : i32
    return %c0_i32, %c0_i32_0 : i32, i32
  }
}

</mosaic_0001>

<llo_original>
// kernel: tpu_custom_call.1
$region0: #{tpu_custom_call.1}
  #allocation0 [shape = 'u32[]', space=smem, size = 0x4, offset = 0x4, fixed_abs, tag = 'smem constant byte address 0x4 - core index']
  #allocation1 [shape = 'u32[72,128]{1,0:T(1,128)}', space=vmem, size = 0x9000, scoped, tag = 'internal scratch']
  #allocation2 [shape = 'f32[1,14]{1,0:T(1,128)}', space=vmem, size = 0x200, scoped, tag = 'scratch operand']
  #allocation3 [shape = 'f32[1,14]{1,0:T(1,128)}', space=vmem, size = 0x200, scoped, tag = 'scratch operand']
  %s0 = inlined_call_operand.hbm [shape: f32[16,14], index: 0, kind: input, shape index: {}]
  %s1 = inlined_call_operand.hbm [shape: f32[16,14], index: 1, kind: input, shape index: {}]
  %s2 = inlined_call_operand.hbm [shape: f32[1,1], index: 2, kind: output, shape index: {}]
  %s3 = sld [smem:[#allocation0]]
  $region34: #{tpu_custom_call.1} parent=0
    _
  %s5 = ssub.s32 1, %s3
  %s6 = scalar_select 0, %s5, %s3
  $region1: #{tpu_custom_call.1} parent=0
    #allocation4 [shape = 'u8[8192]{0}', space=vmem, size = 0x2000, scoped, tag = 'input window, operand 0, single buffered']
    #allocation5 [shape = 's32[1]{0}', space=sflag, size = 0x4, scoped, tag = 'scoped memory for tpu_custom_call.1']
    #allocation6 [shape = 's32[1]{0}', space=sflag, size = 0x4, scoped, tag = 'scoped memory for tpu_custom_call.1']
    #allocation7 [shape = 'u8[8192]{0}', space=vmem, size = 0x2000, scoped, tag = 'input window, operand 1, single buffered']
    #allocation8 [shape = 's32[1]{0}', space=sflag, size = 0x4, scoped, tag = 'scoped memory for tpu_custom_call.1']
    #allocation9 [shape = 'u8[512]{0}', space=vmem, size = 0x400, scoped, tag = 'output window, operand 0, single buffered']
    %7 = vsyncpa [#allocation5], 0
    %8 = vsyncpa [#allocation8], 0
    %9 = vsyncpa [#allocation6], 0
    // Predicated region
    $region2: #{tpu_custom_call.1} parent=1 // pred_check
      _
    $region3: #{tpu_custom_call.1} parent=1 // pred_check_branch
      %11 = sbr.rel (0) target = $region5
    $region4: #{tpu_custom_call.1} parent=1 // pred_region
      %13 = vsyncadd [#allocation5], 0
      %s14 = sshll.u32 %s0, 4
      %s15 = int_to_ptr.hbm [resolvable:$true] %s14
      %s16 = sshll.u32 [#allocation4], 4
      %s17 = int_to_ptr.vmem [resolvable:$true] %s16
      %22 = dma.hbm_to_vmem [thread:$0]  %s15, 256, %s17, [#allocation5], 128, 128, 8
    $region5: #{tpu_custom_call.1} parent=1 // pred_fallthru
      _
    // Predicated region
    $region6: #{tpu_custom_call.1} parent=1 // pred_check
      _
    $region7: #{tpu_custom_call.1} parent=1 // pred_check_branch
      %24 = sbr.rel (0) target = $region9
    $region8: #{tpu_custom_call.1} parent=1 // pred_region
      %26 = vsyncadd [#allocation8], 0
      %s27 = sshll.u32 %s1, 4
      %s28 = int_to_ptr.hbm [resolvable:$true] %s27
      %s29 = sshll.u32 [#allocation7], 4
      %s30 = int_to_ptr.vmem [resolvable:$true] %s29
      %35 = dma.hbm_to_vmem [thread:$0]  %s28, 256, %s30, [#allocation8], 128, 128, 8
    $region9: #{tpu_custom_call.1} parent=1 // pred_fallthru
      _
    // Predicated region
    $region10: #{tpu_custom_call.1} parent=1 // pred_check
      _
    $region11: #{tpu_custom_call.1} parent=1 // pred_check_branch
      %37 = sbr.rel (0) target = $region13
    $region12: #{tpu_custom_call.1} parent=1 // pred_region
      %39 = dma.done [#allocation5], 256
    $region13: #{tpu_custom_call.1} parent=1 // pred_fallthru
      _
    // Predicated region
    $region14: #{tpu_custom_call.1} parent=1 // pred_check
      _
    $region15: #{tpu_custom_call.1} parent=1 // pred_check_branch
      %41 = sbr.rel (0) target = $region17
    $region16: #{tpu_custom_call.1} parent=1 // pred_region
      %43 = dma.done [#allocation8], 256
    $region17: #{tpu_custom_call.1} parent=1 // pred_fallthru
      _
    %p44 = scmp.eq.s32.totalorder 0, 0
    // Predicated region
    $region18: #{tpu_custom_call.1} parent=1 // pred_check
      %p45 = pneg %p44
    $region19: #{tpu_custom_call.1} parent=1 // pred_check_branch
      %47 = sbr.rel (%p45) target = $region21
    $region20: #{tpu_custom_call.1} parent=1 // pred_region
      %vm48 = vcmask 106496
      %49 = vst.msk [vmem:[#allocation2] sm:$0x1] %vm48, 0.0
      %50 = vst.msk [vmem:[#allocation3] sm:$0x1] %vm48, 0.0
    $region21: #{tpu_custom_call.1} parent=1 // pred_fallthru
      _
    %v51 = vld [vmem:[#allocation4] sm:$0xff]
    %v52 = vld [vmem:[#allocation4 + $0x8] sm:$0xff]
    %v53 = vld [vmem:[#allocation7] sm:$0xff]
    %v54 = vld [vmem:[#allocation7 + $0x8] sm:$0xff]
    %vm55 = vcmask 113664
    %v56 = vsel %vm55, %v51, -inf
    %57 = vmax.xlane.f32.xlu0 %v56
    %v58 = vpop.xlane.xlu0 %57
    %v59 = vsel %vm55, %v52, -inf
    %60 = vmax.xlane.f32.xlu0 %v59
    %v61 = vpop.xlane.xlu0 %60
    %v62 = vsub.f32 %v51, %v58
    %v63 = vsub.f32 %v52, %v61
    %v64 = vmul.f32 %v62, 1.442695
    %v65 = vpow.pop %v64
    %v66 = vmul.f32 %v63, 1.442695
    %v67 = vpow.pop %v66
    %v68 = vsel %vm55, %v65, 0.0
    %69 = vadd.xlane.f32.xlu0 %v68
    %v70 = vpop.xlane.xlu0 %69
    %v71 = vsel %vm55, %v67, 0.0
    %72 = vadd.xlane.f32.xlu0 %v71
    %v73 = vpop.xlane.xlu0 %72
    %vm74 = vcmp.lt.f32.partialorder %v70, 2.0
    %vm75 = vcmp.lt.f32.partialorder %v73, 2.0
    %v76 = vlaneseq
    %v77 = vand.u32 %v76, 127
    %vm78 = vcmp.eq.f32.partialorder %v51, %v58
    %vm79 = vcmp.eq.f32.partialorder %v52, %v61
    %v80 = vsel %vm78, %v77, 14
    %v81 = vsel %vm79, %v77, 14
    %v82 = vsel %vm55, %v80, 2147483647
    %v83 = vand.u32 %v82, 65535
    %v84 = vshra.s32 %v82, 16
    %v85 = vcvt.s32.f32 %v83
    %v86 = vcvt.s32.f32 %v84
    %87 = vmin.xlane.f32.xlu0 %v86
    %v88 = vpop.xlane.xlu0 %87
    %vm89 = vcmp.eq.f32.partialorder %v86, %v88
    %v90 = vsel %vm89, %v85, inf
    %91 = vmin.xlane.f32.xlu0 %v90
    %v92 = vpop.xlane.xlu0 %91
    %v93 = vcvt.f32.s32 %v92
    %v94 = vcvt.f32.s32 %v88
    %v95 = vshll.u32 %v94, 16
    %v96 = vadd.s32 %v95, %v93
    %v97 = vsel %vm55, %v81, 2147483647
    %v98 = vand.u32 %v97, 65535
    %v99 = vshra.s32 %v97, 16
    %v100 = vcvt.s32.f32 %v98
    %v101 = vcvt.s32.f32 %v99
    %102 = vmin.xlane.f32.xlu0 %v101
    %v103 = vpop.xlane.xlu0 %102
    %vm104 = vcmp.eq.f32.partialorder %v101, %v103
    %v105 = vsel %vm104, %v100, inf
    %106 = vmin.xlane.f32.xlu0 %v105
    %v107 = vpop.xlane.xlu0 %106
    %v108 = vcvt.f32.s32 %v107
    %v109 = vcvt.f32.s32 %v103
    %v110 = vshll.u32 %v109, 16
    %v111 = vadd.s32 %v110, %v108
    %vm112 = vcmp.eq.s32.totalorder %v77, %v96
    %vm113 = vcmp.eq.s32.totalorder %v77, %v111
    %v114 = vsel %vm55, %v53, -inf
    %115 = vmax.xlane.f32.xlu0 %v114
    %v116 = vpop.xlane.xlu0 %115
    %v117 = vsel %vm55, %v54, -inf
    %118 = vmax.xlane.f32.xlu0 %v117
    %v119 = vpop.xlane.xlu0 %118
    %v120 = vsub.f32 %v53, %v116
    %v121 = vsub.f32 %v54, %v119
    %v122 = vmul.f32 %v120, 1.442695
    %v123 = vpow.pop %v122
    %v124 = vmul.f32 %v121, 1.442695
    %v125 = vpow.pop %v124
    %v126 = vsel %vm55, %v123, 0.0
    %127 = vadd.xlane.f32.xlu0 %v126
    %v128 = vpop.xlane.xlu0 %127
    %v129 = vsel %vm55, %v125, 0.0
    %130 = vadd.xlane.f32.xlu0 %v129
    %v131 = vpop.xlane.xlu0 %130
    %v132 = vlog2.pop %v128
    %v133 = vmul.f32 %v132, 0.6931472
    %v134 = vlog2.pop %v131
    %v135 = vmul.f32 %v134, 0.6931472
    %v136 = vadd.f32 %v116, %v133
    %v137 = vadd.f32 %v119, %v135
    %v138 = vsel %vm112, %v53, 0.0
    %v139 = vsel %vm113, %v54, 0.0
    %v140 = vsel %vm55, %v138, 0.0
    %141 = vadd.xlane.f32.xlu0 %v140
    %v142 = vpop.xlane.xlu0 %141
    %v143 = vsel %vm55, %v139, 0.0
    %144 = vadd.xlane.f32.xlu0 %v143
    %v145 = vpop.xlane.xlu0 %144
    %v146 = vsub.f32 %v136, %v142
    %v147 = vsub.f32 %v137, %v145
    %v148 = vsel %vm74, %v146, 0.0
    %v149 = vsel %vm75, %v147, 0.0
    %v150 = vsel %vm74, 1, 0
    %v151 = vsel %vm75, 1, 0
    %vm152 = vcmp.eq.s32.totalorder %v150, 1
    %vm153 = vcmp.eq.s32.totalorder %v151, 1
    %vm154 = vmand %vm112, %vm152
    %vm155 = vmand %vm113, %vm153
    %v156 = vsel %vm154, 1, 0
    %v157 = vsel %vm155, 1, 0
    %v158 = vcvt.s32.f32 %v156
    %v159 = vcvt.s32.f32 %v157
    %v160 = vld [vmem:[#allocation2] sm:$0x1]
    %v161 = vsel %vm55, %v158, 0.0
    %v162 = vsel %vm55, %v159, 0.0
    %v163 = vadd.f32 %v161, %v162
    %v164 = vrot.slane %v163, 4
    %v165 = vadd.f32 %v163, %v164
    %v166 = vrot.slane %v165, 2
    %v167 = vadd.f32 %v165, %v166
    %v168 = vrot.slane %v167, 1
    %v169 = vadd.f32 %v167, %v168
    %v170 = vadd.f32 %v160, %v169
    %vm171 = vcmask 106496
    %172 = vst.msk [vmem:[#allocation2] sm:$0x1] %vm171, %v170
    %v173 = vld [vmem:[#allocation3] sm:$0x1]
    %v174 = vmul.f32 %v158, %v148
    %v175 = vmul.f32 %v159, %v149
    %v176 = vsel %vm55, %v174, 0.0
    %v177 = vsel %vm55, %v175, 0.0
    %v178 = vadd.f32 %v176, %v177
    %v179 = vrot.slane %v178, 4
    %v180 = vadd.f32 %v178, %v179
    %v181 = vrot.slane %v180, 2
    %v182 = vadd.f32 %v180, %v181
    %v183 = vrot.slane %v182, 1
    %v184 = vadd.f32 %v182, %v183
    %v185 = vadd.f32 %v173, %v184
    %186 = vst.msk [vmem:[#allocation3] sm:$0x1] %vm171, %v185
    // Predicated region
    $region22: #{tpu_custom_call.1} parent=1 // pred_check
      %p187 = pneg %p44
    $region23: #{tpu_custom_call.1} parent=1 // pred_check_branch
      %189 = sbr.rel (%p187) target = $region25
    $region24: #{tpu_custom_call.1} parent=1 // pred_region
      %v190 = vld [vmem:[#allocation2] sm:$0x1]
      %v191 = vld [vmem:[#allocation3] sm:$0x1]
      %v192 = vsel %vm171, %v190, 0.0
      %193 = vadd.xlane.f32.xlu0 %v192
      %v194 = vpop.xlane.xlu0 %193
      %v195 = vmax.f32 %v190, 1.0
      %v196 = vrcp.pop %v195
      %v197 = vmul.f32 %v195, %v196
      %v198 = vsub.f32 1.0, %v197
      %v199 = vmul.f32 %v196, %v198
      %v200 = vadd.f32 %v196, %v199
      %vm201 = vweird.f32 %v195
      %vm202 = vweird.f32 %v196
      %vm203 = vmor %vm201, %vm202
      %v204 = vsel %vm203, %v196, %v200
      %v205 = vand.u32 2147483647, %v195
      %vm206 = vcmp.eq.f32.partialorder %v205, 8.507059e+37
      %v207 = vand.u32 %v195, 2147483648
      %v208 = vor.u32 1.1754944e-38, %v207
      %v209 = vsel %vm206, %v208, %v204
      %v210 = vmul.f32 %v194, %v209
      %v211 = vmul.f32 %v210, %v191
      %v212 = vsel %vm171, %v211, 0.0
      %213 = vadd.xlane.f32.xlu0 %v212
      %v214 = vpop.xlane.xlu0 %213
      %v215 = vmul.f32 %v210, %v190
      %v216 = vsel %vm171, %v215, 0.0
      %217 = vadd.xlane.f32.xlu0 %v216
      %v218 = vpop.xlane.xlu0 %217
      %v219 = vmax.f32 %v218, 1e-30
      %vm220 = vcmp.gt.f32.partialorder %v194, 0.0
      %v221 = vrcp.pop %v219
      %v222 = vmul.f32 %v219, %v221
      %v223 = vsub.f32 1.0, %v222
      %v224 = vmul.f32 %v221, %v223
      %v225 = vadd.f32 %v221, %v224
      %vm226 = vweird.f32 %v219
      %vm227 = vweird.f32 %v221
      %vm228 = vmor %vm226, %vm227
      %v229 = vsel %vm228, %v221, %v225
      %v230 = vand.u32 2147483647, %v219
      %vm231 = vcmp.eq.f32.partialorder %v230, 8.507059e+37
      %v232 = vand.u32 %v219, 2147483648
      %v233 = vor.u32 1.1754944e-38, %v232
      %v234 = vsel %vm231, %v233, %v229
      %v235 = vmul.f32 %v214, %v234
      %v236 = vsel %vm220, %v235, 0.0
      %vm237 = vcmask 0
      %238 = vst.msk [vmem:[#allocation9] sm:$0x1] %vm237, %v236
    $region25: #{tpu_custom_call.1} parent=1 // pred_fallthru
      _
    // Predicated region
    $region26: #{tpu_custom_call.1} parent=1 // pred_check
      _
    $region27: #{tpu_custom_call.1} parent=1 // pred_check_branch
      %240 = sbr.rel (0) target = $region29
    $region28: #{tpu_custom_call.1} parent=1 // pred_region
      %242 = vsyncadd [#allocation6], 0
      %s244 = sshll.u32 [#allocation9], 4
      %s245 = int_to_ptr.vmem [resolvable:$true] %s244
      %s246 = sshll.u32 %s2, 4
      %s247 = int_to_ptr.hbm [resolvable:$true] %s246
      %249 = dma.vmem_to_hbm [thread:$0]  %s245, 16, %s247, [#allocation6]
    $region29: #{tpu_custom_call.1} parent=1 // pred_fallthru
      _
    // Predicated region
    $region30: #{tpu_custom_call.1} parent=1 // pred_check
      _
    $region31: #{tpu_custom_call.1} parent=1 // pred_check_branch
      %251 = sbr.rel (0) target = $region33
    $region32: #{tpu_custom_call.1} parent=1 // pred_region
      %253 = dma.done [#allocation6], 16
    $region33: #{tpu_custom_call.1} parent=1 // pred_fallthru
      _
    %254 = vsyncpa [#allocation5], 1
    %255 = vsyncpa [#allocation8], 1
    %256 = vsyncpa [#allocation6], 1

</llo_original>
